<compile_context>
chip_gen: v7x
topology: tpu7x:2x2x1
jax: 0.10.0
libtpu: 0.0.40
codegen_flags: <defaults>
</compile_context>

<pallas_src>
import functools

import jax
import jax.numpy as jnp
from jax.experimental import pallas as pl
from jax.experimental.pallas import tpu as pltpu


def elastic_cosface_kernel(emb_ref, w_ref, inv_en_ref, inv_wn_ref,
                           label_ref, margin_ref, out_ref, *, s, tn):
    # bf16 operands, f32 accumulate on the MXU.
    raw = jnp.dot(emb_ref[...], w_ref[...],
                  preferred_element_type=jnp.float32)          # (B, TN) f32

    # Post-matmul normalization: cos = (e . w) / (|e| * |w_col|), clamped.
    cos = raw * inv_en_ref[...] * inv_wn_ref[...]
    cos = jnp.clip(cos, -1.0, 1.0)

    # m_hot scatter + "cos_theta[index] -= m_hot": subtract the per-row margin
    # at column == label, only for rows with label != -1 (rows with label == -1
    # are untouched, matching the torch index/where semantics).
    label = label_ref[...]                                     # (B, 1) i32
    col = (jax.lax.broadcasted_iota(jnp.int32, cos.shape, 1)
           + pl.program_id(0) * tn)
    hit = (col == label) & (label != -1)
    out_ref[...] = jnp.where(hit, cos - margin_ref[...], cos) * s


def elastic_cosface(embeddings, weight, label, margin, *, s=64.0, tn=512):
    """embeddings: (B, D), weight: (D, C), label: (B,) int (-1 = ignore),
    margin: (B,) f32 per-sample margin (drawn by the caller)."""
    B, D = embeddings.shape
    D2, C = weight.shape
    assert D == D2

    emb_f32 = embeddings.astype(jnp.float32)
    w_f32 = weight.astype(jnp.float32)

    # Normalizers computed once in f32 (tiny: (B,1) and (1,C)); streamed
    # operands are bf16.
    inv_en = jax.lax.rsqrt(jnp.sum(emb_f32 * emb_f32, axis=1, keepdims=True))
    inv_wn = jax.lax.rsqrt(jnp.sum(w_f32 * w_f32, axis=0, keepdims=True))
    emb_bf = emb_f32.astype(jnp.bfloat16)
    w_bf = w_f32.astype(jnp.bfloat16)

    # Lane-aligned column tile (multiple of 128); pad C so the grid divides.
    tn = int(max(128, min(tn, pl.next_power_of_2(C))))
    c_pad = pl.cdiv(C, tn) * tn
    if c_pad != C:
        w_bf = jnp.pad(w_bf, ((0, 0), (0, c_pad - C)))
        inv_wn = jnp.pad(inv_wn, ((0, 0), (0, c_pad - C)), constant_values=1.0)

    grid = (c_pad // tn,)
    kern = functools.partial(elastic_cosface_kernel, s=float(s), tn=tn)

    out = pl.pallas_call(
        kern,
        out_shape=jax.ShapeDtypeStruct((B, c_pad), jnp.float32),
        grid_spec=pltpu.PrefetchScalarGridSpec(
            num_scalar_prefetch=0,
            grid=grid,
            in_specs=[
                pl.BlockSpec((B, D), lambda j: (0, 0)),    # emb (resident)
                pl.BlockSpec((D, tn), lambda j: (0, j)),   # weight (streamed)
                pl.BlockSpec((B, 1), lambda j: (0, 0)),    # inv_en (resident)
                pl.BlockSpec((1, tn), lambda j: (0, j)),   # inv_wn (streamed)
                pl.BlockSpec((B, 1), lambda j: (0, 0)),    # label (resident)
                pl.BlockSpec((B, 1), lambda j: (0, 0)),    # margin (resident)
            ],
            out_specs=pl.BlockSpec((B, tn), lambda j: (0, j)),
        ),
        compiler_params=pltpu.CompilerParams(
            dimension_semantics=("parallel",)),
        cost_estimate=pl.CostEstimate(
            flops=2 * B * D * c_pad,
            transcendentals=0,
            bytes_accessed=(emb_bf.size * 2 + w_bf.size * 2
                            + B * c_pad * 4 + inv_wn.size * 4
                            + inv_en.size * 4 + 2 * B * 4)),
    )(
        emb_bf, w_bf, inv_en, inv_wn,
        label.reshape(B, 1).astype(jnp.int32),
        margin.reshape(B, 1).astype(jnp.float32),
    )
    return out[:, :C]


if __name__ == "__main__":
    # Small shapes consistent with the module: batch=8, in_features=32,
    # out_features=512 classes; tn=128 so the class grid has 4 tiles.
    B, D, C = 8, 32, 512
    s, m, std = 64.0, 0.35, 0.0125

    key = jax.random.PRNGKey(0)
    k_emb, k_w, k_lab, k_m = jax.random.split(key, 4)

    emb = jax.random.normal(k_emb, (B, D), jnp.float32)
    # nn.init.normal_(self.kernel, std=0.01), shape (in_features, out_features)
    weight = 0.01 * jax.random.normal(k_w, (D, C), jnp.float32)
    label = jax.random.randint(k_lab, (B,), 0, C, jnp.int32).at[0].set(-1)
    # torch.normal(mean=m, std=std) per sample (drawn in JAX glue).
    margin = m + std * jax.random.normal(k_m, (B,), jnp.float32)

    # TODO(synk): plus=True branch (sort-matched margins) needs a sort of the
    # target cosines; only the default plus=False path is implemented here.

    out = jax.block_until_ready(
        elastic_cosface(emb, weight, label, margin, s=s, tn=128))
    assert out.shape == (B, C) and out.dtype == jnp.float32

    hit = (jnp.arange(C)[None, :] == label[:, None]) & (label[:, None] != -1)

    # Reference 1: same bf16-operand math (tight check of kernel logic).
    inv_en = jax.lax.rsqrt(jnp.sum(emb * emb, axis=1, keepdims=True))
    inv_wn = jax.lax.rsqrt(jnp.sum(weight * weight, axis=0, keepdims=True))
    emb_b = emb.astype(jnp.bfloat16).astype(jnp.float32)
    w_b = weight.astype(jnp.bfloat16).astype(jnp.float32)
    cos_b = jnp.clip((emb_b @ w_b) * inv_en * inv_wn, -1.0, 1.0)
    ref_b = jnp.where(hit, cos_b - margin[:, None], cos_b) * s
    assert jnp.allclose(out, ref_b, atol=3e-2, rtol=1e-3), \
        float(jnp.max(jnp.abs(out - ref_b)))

    # Reference 2: pure-f32 PyTorch semantics (loose; bf16 streaming error).
    emb_n = emb / jnp.linalg.norm(emb, axis=1, keepdims=True)
    w_n = weight / jnp.linalg.norm(weight, axis=0, keepdims=True)
    cos = jnp.clip(emb_n @ w_n, -1.0, 1.0)
    ref = jnp.where(hit, cos - margin[:, None], cos) * s
    assert jnp.allclose(out, ref, atol=2.0), float(jnp.max(jnp.abs(out - ref)))

    print("KERNEL_OK")
</pallas_src>

<mosaic_0001>
module attributes {stable_mosaic.version = 11 : i64} {
  func.func @elastic_cosface_kernel(%arg0: i32, %arg1: memref<8x32xbf16, #tpu.memory_space<vmem>>, %arg2: memref<32x128xbf16, #tpu.memory_space<vmem>>, %arg3: memref<8x1xf32, #tpu.memory_space<vmem>>, %arg4: memref<1x128xf32, #tpu.memory_space<vmem>>, %arg5: memref<8x1xi32, #tpu.memory_space<vmem>>, %arg6: memref<8x1xf32, #tpu.memory_space<vmem>>, %arg7: memref<8x128xf32, #tpu.memory_space<vmem>>) attributes {dimension_semantics = [#tpu.dimension_semantics<parallel>], iteration_bounds = array<i64: 4>, scalar_prefetch = 0 : i64, scratch_operands = 0 : i64, tpu.core_type = #tpu.core_type<tc>, window_params = [{pipeline_mode = #tpu.pipeline_mode<synchronous>, transform_indices = @transform_0, window_bounds = array<i64: 8, 32>}, {transform_indices = @transform_1, window_bounds = array<i64: 32, 128>}, {pipeline_mode = #tpu.pipeline_mode<synchronous>, transform_indices = @transform_2, window_bounds = array<i64: 8, 1>}, {transform_indices = @transform_3, window_bounds = array<i64: 1, 128>}, {pipeline_mode = #tpu.pipeline_mode<synchronous>, transform_indices = @transform_4, window_bounds = array<i64: 8, 1>}, {pipeline_mode = #tpu.pipeline_mode<synchronous>, transform_indices = @transform_5, window_bounds = array<i64: 8, 1>}, {transform_indices = @transform_6, window_bounds = array<i64: 8, 128>}]} {
    %c0 = arith.constant 0 : index
    %c0_0 = arith.constant 0 : index
    %0 = vector.load %arg1[%c0, %c0_0] : memref<8x32xbf16, #tpu.memory_space<vmem>>, vector<8x32xbf16>
    %c0_1 = arith.constant 0 : index
    %c0_2 = arith.constant 0 : index
    %1 = vector.load %arg2[%c0_1, %c0_2] : memref<32x128xbf16, #tpu.memory_space<vmem>>, vector<32x128xbf16>
    %cst = arith.constant dense<0.000000e+00> : vector<8x128xf32>
    %2 = tpu.matmul %0, %1, %cst {dimension_numbers = #tpu.dot_dimension_numbers<[1], [0], [0], [1], [0, 0, 1, 1], [], []>} : vector<8x32xbf16>, vector<32x128xbf16>, vector<8x128xf32> -> vector<8x128xf32>
    %c0_3 = arith.constant 0 : index
    %c0_4 = arith.constant 0 : index
    %3 = vector.load %arg3[%c0_3, %c0_4] : memref<8x1xf32, #tpu.memory_space<vmem>>, vector<8x1xf32>
    %4 = vector.broadcast %3 : vector<8x1xf32> to vector<8x128xf32>
    %5 = arith.mulf %2, %4 : vector<8x128xf32>
    %c0_5 = arith.constant 0 : index
    %c0_6 = arith.constant 0 : index
    %6 = vector.load %arg4[%c0_5, %c0_6] : memref<1x128xf32, #tpu.memory_space<vmem>>, vector<1x128xf32>
    %7 = vector.broadcast %6 : vector<1x128xf32> to vector<8x128xf32>
    %8 = arith.mulf %5, %7 : vector<8x128xf32>
    %cst_7 = arith.constant -1.000000e+00 : f32
    %cst_8 = arith.constant 1.000000e+00 : f32
    %9 = vector.broadcast %cst_7 : f32 to vector<8x128xf32>
    %10 = arith.maximumf %9, %8 : vector<8x128xf32>
    %11 = vector.broadcast %cst_8 : f32 to vector<8x128xf32>
    %12 = arith.minimumf %11, %10 : vector<8x128xf32>
    %c0_9 = arith.constant 0 : index
    %c0_10 = arith.constant 0 : index
    %13 = vector.load %arg5[%c0_9, %c0_10] : memref<8x1xi32, #tpu.memory_space<vmem>>, vector<8x1xi32>
    %14 = tpu.iota {dimensions = array<i32: 1>} : vector<8x128xi32>
    %c128_i32 = arith.constant 128 : i32
    %15 = arith.muli %arg0, %c128_i32 : i32
    %16 = vector.broadcast %15 : i32 to vector<8x128xi32>
    %17 = arith.addi %14, %16 : vector<8x128xi32>
    %18 = vector.broadcast %13 : vector<8x1xi32> to vector<8x128xi32>
    %19 = arith.cmpi eq, %17, %18 : vector<8x128xi32>
    %c-1_i32 = arith.constant -1 : i32
    %20 = vector.broadcast %c-1_i32 : i32 to vector<8x1xi32>
    %21 = arith.cmpi ne, %13, %20 : vector<8x1xi32>
    %22 = vector.broadcast %21 : vector<8x1xi1> to vector<8x128xi1>
    %23 = arith.andi %19, %22 : vector<8x128xi1>
    %c0_11 = arith.constant 0 : index
    %c0_12 = arith.constant 0 : index
    %24 = vector.load %arg6[%c0_11, %c0_12] : memref<8x1xf32, #tpu.memory_space<vmem>>, vector<8x1xf32>
    %25 = vector.broadcast %24 : vector<8x1xf32> to vector<8x128xf32>
    %26 = arith.subf %12, %25 : vector<8x128xf32>
    %27 = arith.select %23, %26, %12 : vector<8x128xi1>, vector<8x128xf32>
    %cst_13 = arith.constant 6.400000e+01 : f32
    %28 = vector.broadcast %cst_13 : f32 to vector<8x128xf32>
    %29 = arith.mulf %27, %28 : vector<8x128xf32>
    %c0_14 = arith.constant 0 : index
    %c0_15 = arith.constant 0 : index
    %30 = vector.load %arg7[%c0_14, %c0_15] : memref<8x128xf32, #tpu.memory_space<vmem>>, vector<8x128xf32>
    tpu.vector_store %arg7[%c0_14, %c0_15], %29 {strides = array<i32>} : memref<8x128xf32, #tpu.memory_space<vmem>>, vector<8x128xf32>,
    return
  }
  func.func @transform_0(%arg0: i32) -> (i32, i32) {
    %c0_i32 = arith.constant 0 : i32
    %c0_i32_0 = arith.constant 0 : i32
    %c0_i32_1 = arith.constant 0 : i32
    return %c0_i32, %c0_i32_0 : i32, i32
  }
  func.func @transform_1(%arg0: i32) -> (i32, i32) {
    %c0_i32 = arith.constant 0 : i32
    %c0_i32_0 = arith.constant 0 : i32
    return %c0_i32, %arg0 : i32, i32
  }
  func.func @transform_2(%arg0: i32) -> (i32, i32) {
    %c0_i32 = arith.constant 0 : i32
    %c0_i32_0 = arith.constant 0 : i32
    %c0_i32_1 = arith.constant 0 : i32
    return %c0_i32, %c0_i32_0 : i32, i32
  }
  func.func @transform_3(%arg0: i32) -> (i32, i32) {
    %c0_i32 = arith.constant 0 : i32
    %c0_i32_0 = arith.constant 0 : i32
    return %c0_i32, %arg0 : i32, i32
  }
  func.func @transform_4(%arg0: i32) -> (i32, i32) {
    %c0_i32 = arith.constant 0 : i32
    %c0_i32_0 = arith.constant 0 : i32
    %c0_i32_1 = arith.constant 0 : i32
    return %c0_i32, %c0_i32_0 : i32, i32
  }
  func.func @transform_5(%arg0: i32) -> (i32, i32) {
    %c0_i32 = arith.constant 0 : i32
    %c0_i32_0 = arith.constant 0 : i32
    %c0_i32_1 = arith.constant 0 : i32
    return %c0_i32, %c0_i32_0 : i32, i32
  }
  func.func @transform_6(%arg0: i32) -> (i32, i32) {
    %c0_i32 = arith.constant 0 : i32
    %c0_i32_0 = arith.constant 0 : i32
    return %c0_i32, %arg0 : i32, i32
  }
}

</mosaic_0001>

<llo_original>
// kernel: tpu_custom_call.1
$region0: #{tpu_custom_call.1}
  #allocation0 [shape = 'u32[]', space=smem, size = 0x4, offset = 0x4, fixed_abs, tag = 'smem constant byte address 0x4 - core index']
  #allocation1 [shape = 'u32[144,128]{1,0:T(1,128)}', space=vmem, size = 0x12000, scoped, tag = 'internal scratch']
  %s0 = inlined_call_operand.vmem [shape: bf16[8,32], index: 0, kind: input, shape index: {}]
  %s1 = inlined_call_operand.hbm [shape: bf16[32,512], index: 1, kind: input, shape index: {}]
  %s2 = inlined_call_operand.vmem [shape: f32[8,1], index: 2, kind: input, shape index: {}]
  %s3 = inlined_call_operand.vmem [shape: f32[1,512], index: 3, kind: input, shape index: {}]
  %s4 = inlined_call_operand.vmem [shape: s32[8,1], index: 4, kind: input, shape index: {}]
  %s5 = inlined_call_operand.vmem [shape: f32[8,1], index: 5, kind: input, shape index: {}]
  %s6 = inlined_call_operand.hbm [shape: f32[8,512], index: 6, kind: output, shape index: {}]
  %s7 = sld [smem:[#allocation0]]
  $region61: #{tpu_custom_call.1} parent=0
    _
  %s9 = ssub.s32 1, %s7
  %s10 = scalar_select 0, %s9, %s7
  $region1: #{tpu_custom_call.1} parent=0
    #allocation2 [shape = 'u8[16384]{0}', space=vmem, size = 0x4000, scoped, tag = 'input window, operand 1']
    #allocation3 [shape = 's32[2]{0}', space=sflag, size = 0x8, scoped, tag = 'scoped memory for tpu_custom_call.1']
    #allocation4 [shape = 's32[2]{0}', space=sflag, size = 0x8, scoped, tag = 'scoped memory for tpu_custom_call.1']
    #allocation5 [shape = 'u8[8192]{0}', space=vmem, size = 0x2000, scoped, tag = 'output window, operand 0']
    %11 = vsyncpa [#allocation3], 0
    %s12 = scalar_lea.sflag [#allocation3], 1
    %13 = vsyncpa %s12, 0
    %14 = vsyncpa [#allocation4], 0
    %s15 = scalar_lea.sflag [#allocation4], 1
    %16 = vsyncpa %s15, 0
    loop: start=0, step=1, limit=6
    $region2: #{tpu_custom_call.1} parent=1 // loop_pre_header
      _
    $region3: #{tpu_custom_call.1} parent=1 // loop_header
      %s18 = sphi 0, %s22
      %p19 = scmp.ge.s32.totalorder %s18, 6
      %s26 = sphi 0, %s26
      %s28 = sphi 0, %s26
      %s29 = sphi 0, %s28
      %s43 = sphi 0, %s29
      %s49 = sphi 0, %s51
      %s52 = sphi 0, %s49
      %s53 = sphi 0, %s52
      %s69 = sphi 0, %s53
      %s73 = sphi 0, %s73
      %s75 = sphi 0, %s73
      %s76 = sphi 0, %s75
      %s90 = sphi 0, %s76
      %s96 = sphi 0, %s98
      %s99 = sphi 0, %s96
      %s100 = sphi 0, %s99
      %s116 = sphi 0, %s100
      %s120 = sphi 0, %s120
      %s122 = sphi 0, %s120
      %s123 = sphi 0, %s122
      %s137 = sphi 0, %s123
      %s141 = sphi 0, %s141
      %s143 = sphi 0, %s141
      %s144 = sphi 0, %s143
      %s158 = sphi 0, %s144
      %s164 = sphi 0, %s166
      %s167 = sphi 0, %s164
      %s168 = sphi 0, %s167
      %s184 = sphi 0, %s168
    $region4: #{tpu_custom_call.1} parent=1 // loop_header_branch
      %21 = sbr.rel (%p19) target = $region8
    $region5: #{tpu_custom_call.1} parent=1 // loop_body
      %s23 = ssub.s32 %s18, 1
      %s24 = ssub.s32 %s18, 2
      %s25 = sadd.s32 %s18, 1
      %s27 = sadd.s32 %s26, 1
      %p30 = scmp.eq.s32.totalorder %s18, 3
      %p31 = scmp.ne.s32.totalorder %s26, %s28
      %p32 = scmp.eq.s32.totalorder %s18, 0
      %p33 = por %p31, %p32
      %p34 = scmp.ne.s32.totalorder %s26, %s28
      %p35 = scmp.eq.s32.totalorder %s23, 3
      %p36 = por %p34, %p35
      %p37 = scmp.ne.s32.totalorder %s28, %s29
      %p38 = scmp.eq.s32.totalorder %s23, 0
      %p39 = por %p37, %p38
      %p40 = scmp.ne.s32.totalorder %s28, %s29
      %p41 = scmp.eq.s32.totalorder %s24, 3
      %p42 = por %p40, %p41
      %p44 = scmp.ne.s32.totalorder %s29, %s43
      %p45 = scmp.eq.s32.totalorder %s24, 0
      %p46 = por %p44, %p45
      %s47 = ssub.s32 %s18, %s25
      %p48 = scmp.eq.s32.totalorder %s47, 0
      %s50 = sadd.s32 %s49, 1
      %s51 = scalar_select %p48, %s49, %s50
      %p54 = pneg %p48
      %p55 = scmp.eq.s32.totalorder %s18, 3
      %p56 = por %p54, %p55
      %p57 = scmp.ne.s32.totalorder %s49, %s52
      %p58 = scmp.eq.s32.totalorder %s18, 0
      %p59 = por %p57, %p58
      %p60 = scmp.ne.s32.totalorder %s49, %s52
      %p61 = scmp.eq.s32.totalorder %s23, 3
      %p62 = por %p60, %p61
      %p63 = scmp.ne.s32.totalorder %s52, %s53
      %p64 = scmp.eq.s32.totalorder %s23, 0
      %p65 = por %p63, %p64
      %p66 = scmp.ne.s32.totalorder %s52, %s53
      %p67 = scmp.eq.s32.totalorder %s24, 3
      %p68 = por %p66, %p67
      %p70 = scmp.ne.s32.totalorder %s53, %s69
      %p71 = scmp.eq.s32.totalorder %s24, 0
      %p72 = por %p70, %p71
      %s74 = sadd.s32 %s73, 1
      %p77 = scmp.eq.s32.totalorder %s18, 3
      %p78 = scmp.ne.s32.totalorder %s73, %s75
      %p79 = scmp.eq.s32.totalorder %s18, 0
      %p80 = por %p78, %p79
      %p81 = scmp.ne.s32.totalorder %s73, %s75
      %p82 = scmp.eq.s32.totalorder %s23, 3
      %p83 = por %p81, %p82
      %p84 = scmp.ne.s32.totalorder %s75, %s76
      %p85 = scmp.eq.s32.totalorder %s23, 0
      %p86 = por %p84, %p85
      %p87 = scmp.ne.s32.totalorder %s75, %s76
      %p88 = scmp.eq.s32.totalorder %s24, 3
      %p89 = por %p87, %p88
      %p91 = scmp.ne.s32.totalorder %s76, %s90
      %p92 = scmp.eq.s32.totalorder %s24, 0
      %p93 = por %p91, %p92
      %s94 = ssub.s32 %s18, %s25
      %p95 = scmp.eq.s32.totalorder %s94, 0
      %s97 = sadd.s32 %s96, 1
      %s98 = scalar_select %p95, %s96, %s97
      %p101 = pneg %p95
      %p102 = scmp.eq.s32.totalorder %s18, 3
      %p103 = por %p101, %p102
      %p104 = scmp.ne.s32.totalorder %s96, %s99
      %p105 = scmp.eq.s32.totalorder %s18, 0
      %p106 = por %p104, %p105
      %p107 = scmp.ne.s32.totalorder %s96, %s99
      %p108 = scmp.eq.s32.totalorder %s23, 3
      %p109 = por %p107, %p108
      %p110 = scmp.ne.s32.totalorder %s99, %s100
      %p111 = scmp.eq.s32.totalorder %s23, 0
      %p112 = por %p110, %p111
      %p113 = scmp.ne.s32.totalorder %s99, %s100
      %p114 = scmp.eq.s32.totalorder %s24, 3
      %p115 = por %p113, %p114
      %p117 = scmp.ne.s32.totalorder %s100, %s116
      %p118 = scmp.eq.s32.totalorder %s24, 0
      %p119 = por %p117, %p118
      %s121 = sadd.s32 %s120, 1
      %p124 = scmp.eq.s32.totalorder %s18, 3
      %p125 = scmp.ne.s32.totalorder %s120, %s122
      %p126 = scmp.eq.s32.totalorder %s18, 0
      %p127 = por %p125, %p126
      %p128 = scmp.ne.s32.totalorder %s120, %s122
      %p129 = scmp.eq.s32.totalorder %s23, 3
      %p130 = por %p128, %p129
      %p131 = scmp.ne.s32.totalorder %s122, %s123
      %p132 = scmp.eq.s32.totalorder %s23, 0
      %p133 = por %p131, %p132
      %p134 = scmp.ne.s32.totalorder %s122, %s123
      %p135 = scmp.eq.s32.totalorder %s24, 3
      %p136 = por %p134, %p135
      %p138 = scmp.ne.s32.totalorder %s123, %s137
      %p139 = scmp.eq.s32.totalorder %s24, 0
      %p140 = por %p138, %p139
      %s142 = sadd.s32 %s141, 1
      %p145 = scmp.eq.s32.totalorder %s18, 3
      %p146 = scmp.ne.s32.totalorder %s141, %s143
      %p147 = scmp.eq.s32.totalorder %s18, 0
      %p148 = por %p146, %p147
      %p149 = scmp.ne.s32.totalorder %s141, %s143
      %p150 = scmp.eq.s32.totalorder %s23, 3
      %p151 = por %p149, %p150
      %p152 = scmp.ne.s32.totalorder %s143, %s144
      %p153 = scmp.eq.s32.totalorder %s23, 0
      %p154 = por %p152, %p153
      %p155 = scmp.ne.s32.totalorder %s143, %s144
      %p156 = scmp.eq.s32.totalorder %s24, 3
      %p157 = por %p155, %p156
      %p159 = scmp.ne.s32.totalorder %s144, %s158
      %p160 = scmp.eq.s32.totalorder %s24, 0
      %p161 = por %p159, %p160
      %s162 = ssub.s32 %s18, %s25
      %p163 = scmp.eq.s32.totalorder %s162, 0
      %s165 = sadd.s32 %s164, 1
      %s166 = scalar_select %p163, %s164, %s165
      %p169 = pneg %p163
      %p170 = scmp.eq.s32.totalorder %s18, 3
      %p171 = por %p169, %p170
      %p172 = scmp.ne.s32.totalorder %s164, %s167
      %p173 = scmp.eq.s32.totalorder %s18, 0
      %p174 = por %p172, %p173
      %p175 = scmp.ne.s32.totalorder %s164, %s167
      %p176 = scmp.eq.s32.totalorder %s23, 3
      %p177 = por %p175, %p176
      %p178 = scmp.ne.s32.totalorder %s167, %s168
      %p179 = scmp.eq.s32.totalorder %s23, 0
      %p180 = por %p178, %p179
      %p181 = scmp.ne.s32.totalorder %s167, %s168
      %p182 = scmp.eq.s32.totalorder %s24, 3
      %p183 = por %p181, %p182
      %p185 = scmp.ne.s32.totalorder %s168, %s184
      %p186 = scmp.eq.s32.totalorder %s24, 0
      %p187 = por %p185, %p186
      %p188 = scmp.le.s32.totalorder 1, %s18
      %p189 = scmp.lt.s32.totalorder %s18, 5
      %p190 = pnand %p188, %p189
      %p191 = pneg %p190
      // Predicated region
      $region9: #{tpu_custom_call.1} parent=5 // pred_check
        _
      $region10: #{tpu_custom_call.1} parent=5 // pred_check_branch
        %193 = sbr.rel (%p190) target = $region12
      $region11: #{tpu_custom_call.1} parent=5 // pred_region
        %s194 = ssub.s32 %s18, 1
        // Predicated region
        $region13: #{tpu_custom_call.1} parent=11 // pred_check
          %p195 = pneg %p39
        $region14: #{tpu_custom_call.1} parent=11 // pred_check_branch
          %197 = sbr.rel (%p195) target = $region16
        $region15: #{tpu_custom_call.1} parent=11 // pred_region
          _
        $region16: #{tpu_custom_call.1} parent=11 // pred_fallthru
          _
        // Predicated region
        $region17: #{tpu_custom_call.1} parent=11 // pred_check
          %p198 = pneg %p86
        $region18: #{tpu_custom_call.1} parent=11 // pred_check_branch
          %200 = sbr.rel (%p198) target = $region20
        $region19: #{tpu_custom_call.1} parent=11 // pred_region
          _
        $region20: #{tpu_custom_call.1} parent=11 // pred_fallthru
          _
        // Predicated region
        $region21: #{tpu_custom_call.1} parent=11 // pred_check
          %p201 = pneg %p133
        $region22: #{tpu_custom_call.1} parent=11 // pred_check_branch
          %203 = sbr.rel (%p201) target = $region24
        $region23: #{tpu_custom_call.1} parent=11 // pred_region
          _
        $region24: #{tpu_custom_call.1} parent=11 // pred_fallthru
          _
        // Predicated region
        $region25: #{tpu_custom_call.1} parent=11 // pred_check
          %p204 = pneg %p154
        $region26: #{tpu_custom_call.1} parent=11 // pred_check_branch
          %206 = sbr.rel (%p204) target = $region28
        $region27: #{tpu_custom_call.1} parent=11 // pred_region
          _
        $region28: #{tpu_custom_call.1} parent=11 // pred_fallthru
          _
      $region12: #{tpu_custom_call.1} parent=5 // pred_fallthru
        _
      %p207 = scmp.lt.s32.totalorder %s18, 4
      // Predicated region
      $region29: #{tpu_custom_call.1} parent=5 // pred_check
        %p208 = pneg %p207
      $region30: #{tpu_custom_call.1} parent=5 // pred_check_branch
        %210 = sbr.rel (%p208) target = $region32
      $region31: #{tpu_custom_call.1} parent=5 // pred_region
        // Predicated region
        $region33: #{tpu_custom_call.1} parent=31 // pred_check
          %p211 = pneg %p59
        $region34: #{tpu_custom_call.1} parent=31 // pred_check_branch
          %213 = sbr.rel (%p211) target = $region36
        $region35: #{tpu_custom_call.1} parent=31 // pred_region
          %s214 = sand.u32 %s49, 1
          %s215 = scalar_lea.sflag [#allocation3], %s214
          %s216 = sand.u32 %s49, 1
          %s217 = smul.addr %s216, 16
          %s218 = scalar_lea.vmem [#allocation2], %s217
          %s220 = ssub.s32 256, 256
          %221 = vsyncadd %s215, %s220
          %s222 = smul.addr %s18, 64
          %s223 = scalar_lea.hbm %s1, %s222
          %s224 = sshll.u32 %s218, 4
          %s225 = int_to_ptr.vmem [resolvable:$true] %s224
          %230 = dma.hbm_to_vmem [thread:$0]  %s223, 256, %s225, %s215, 256, 64, 4
        $region36: #{tpu_custom_call.1} parent=31 // pred_fallthru
          _
        // Predicated region
        $region37: #{tpu_custom_call.1} parent=31 // pred_check
          %p231 = pneg %p106
        $region38: #{tpu_custom_call.1} parent=31 // pred_check_branch
          %233 = sbr.rel (%p231) target = $region40
        $region39: #{tpu_custom_call.1} parent=31 // pred_region
          %p234 = scmp.lt.s32.totalorder %s18, 3
          %s235 = scalar_select %p234, %s18, 3
          %s236 = scalar_lea.vmem %s3, %s235
        $region40: #{tpu_custom_call.1} parent=31 // pred_fallthru
          _
      $region32: #{tpu_custom_call.1} parent=5 // pred_fallthru
        _
      %p237 = scmp.le.s32.totalorder 1, %s18
      %p238 = scmp.lt.s32.totalorder %s18, 5
      %p239 = pnand %p237, %p238
      %p240 = pneg %p239
      // Predicated region
      $region41: #{tpu_custom_call.1} parent=5 // pred_check
        _
      $region42: #{tpu_custom_call.1} parent=5 // pred_check_branch
        %242 = sbr.rel (%p239) target = $region44
      $region43: #{tpu_custom_call.1} parent=5 // pred_region
        %s243 = ssub.s32 %s18, 1
        %s244 = sand.u32 %s52, 1
        %s245 = scalar_lea.sflag [#allocation3], %s244
        %s246 = sand.u32 %s52, 1
        %s247 = smul.addr %s246, 16
        %s248 = scalar_lea.vmem [#allocation2], %s247
        // Predicated region
        $region45: #{tpu_custom_call.1} parent=43 // pred_check
          %p249 = pneg %p65
        $region46: #{tpu_custom_call.1} parent=43 // pred_check_branch
          %251 = sbr.rel (%p249) target = $region48
        $region47: #{tpu_custom_call.1} parent=43 // pred_region
          %252 = dma.done %s245, 256
        $region48: #{tpu_custom_call.1} parent=43 // pred_fallthru
          _
        %p253 = pneg %p39
        %p254 = pneg %p36
        %s255 = sand.u32 %s52, 1
        %s256 = scalar_lea.sflag [#allocation3], %s255
        %s257 = sand.u32 %s52, 1
        %s258 = smul.addr %s257, 16
        %s259 = scalar_lea.vmem [#allocation2], %s258
        %p260 = pneg %p65
        %p261 = pneg %p62
        %p262 = pneg %p86
        %p263 = pneg %p83
        %p264 = scmp.lt.s32.totalorder %s23, 3
        %s265 = scalar_select %p264, %s23, 3
        %s266 = scalar_lea.vmem %s3, %s265
        %p267 = pneg %p112
        %p268 = pneg %p109
        %p269 = pneg %p133
        %p270 = pneg %p130
        %p271 = pneg %p154
        %p272 = pneg %p151
        %p273 = pneg %p180
        %p274 = pneg %p177
        %s275 = sand.u32 %s167, 1
        %s276 = scalar_lea.sflag [#allocation4], %s275
        %s277 = sand.u32 %s167, 1
        %s278 = smul.addr %s277, 8
        %s279 = scalar_lea.vmem [#allocation5], %s278
        %p280 = scmp.lt.s32.totalorder %s23, 3
        %s281 = scalar_select %p280, %s23, 3
        %s282 = scalar_lea.vmem %s3, %s281
        %v284 = vld [vmem:[%s0] sm:$0xf]
        %v285 = vld [vmem:[%s248] sm:$0xf]
        %v286 = vld [vmem:[%s248 + $0x4] sm:$0xf]
        %v287 = vld [vmem:[%s248 + $0x8] sm:$0xf]
        %v288 = vld [vmem:[%s248 + $0xc] sm:$0xf]
        %v293 = vunpack.c.l.b16 %v285
        %v294 = vunpack.c.l.b16 %v286
        %v295 = vunpack.c.l.b16 %v287
        %v296 = vunpack.c.l.b16 %v288
        %v297 = vpack.c.b16 %v294, %v293
        %v298 = vpack.c.b16 %v296, %v295
        %vm301 = vcmask 261120
        %v303 = vsel %vm301, %v284, 0
        %305 = vmatprep.subr.bf16.mxu0 0
        %306 = vmatpush1.bf16.msra.mxu0 %v297
        %307 = vmatprep.subr.bf16.mxu0 0
        %308 = vmatpush1.bf16.msra.mxu0 %v298
        %309 = vmatprep.subr.bf16.mxu0 0
        %310 = vmatpush1.bf16.msra.mxu0 0
        %311 = vmatprep.subr.bf16.mxu0 0
        %312 = vmatpush1.bf16.msra.mxu0 0
        %313 = vmatprep.subr.bf16.mxu0 0
        %314 = vmatpush1.bf16.msra.mxu0 0
        %315 = vmatprep.subr.bf16.mxu0 0
        %316 = vmatpush1.bf16.msra.mxu0 0
        %317 = vmatprep.subr.bf16.mxu0 0
        %318 = vmatpush1.bf16.msra.mxu0 0
        %319 = vmatprep.subr.bf16.mxu0 0
        %320 = vmatpush1.bf16.msra.mxu0 0
        %321 = vmatprep.subr.bf16.mxu0 0
        %322 = vmatpush1.bf16.msra.mxu0 0
        %323 = vmatprep.subr.bf16.mxu0 0
        %324 = vmatpush1.bf16.msra.mxu0 0
        %325 = vmatprep.subr.bf16.mxu0 0
        %326 = vmatpush1.bf16.msra.mxu0 0
        %327 = vmatprep.subr.bf16.mxu0 0
        %328 = vmatpush1.bf16.msra.mxu0 0
        %329 = vmatprep.subr.bf16.mxu0 0
        %330 = vmatpush1.bf16.msra.mxu0 0
        %331 = vmatprep.subr.bf16.mxu0 0
        %332 = vmatpush1.bf16.msra.mxu0 0
        %333 = vmatprep.subr.bf16.mxu0 0
        %334 = vmatpush1.bf16.msra.mxu0 0
        %335 = vmatprep.subr.bf16.mxu0 0
        %336 = vmatpush1.bf16.msra.mxu0 0
        %337 = vmatprep.mubr.bf16.mxu0 0
        %338 = vmatmul.mubr.bf16.gmra.mrb[0].mxu0 %v303
        %v339 = vpop.f32.mrb[0].mxu0
        %v340 = vadd.f32 0.0, %v339
        %v341 = vpop.f32.mrb[0].mxu0
        %v342 = vpop.f32.mrb[0].mxu0
        %v343 = vpop.f32.mrb[0].mxu0
        %344 = vdwg.mxu0
        %v345 = vld [vmem:[%s2] sm:$0xff]
        %347 = vset.pattern.permute.xlu0 0
        %348 = vperm.xlu0 %347, %v345
        %v349 = vpop.permute.xlu0 %348
        %v351 = vmul.f32 %v340, %v349
        %v352 = vld [vmem:[%s282] sm:$0x1]
        %v354 = vlaneseq
        %v355 = vshrl.u32 %v354, 7
        %v356 = vsub.s32 0, %v355
        %v357 = vrot.slane %v352, %v356
        %v359 = vmul.f32 %v351, %v357
        %v360 = vmax.f32 %v359, -1.0
        %v361 = vmin.f32 %v360, 1.0
        %v362 = vld [vmem:[%s4] sm:$0xff]
        %v363 = vlaneseq
        %v364 = vand.u32 %v363, 127
        %s365 = smul.u32 %s23, 128
        %v366 = vstv %s365
        %v367 = vadd.s32 %v364, %v366
        %368 = vset.pattern.permute.xlu0 0
        %369 = vperm.xlu0 %368, %v362
        %v370 = vpop.permute.xlu0 %369
        %vm371 = vcmp.eq.s32.totalorder %v367, %v370
        %vm372 = vcmp.ne.s32.totalorder %v362, 4294967295
        %v373 = vsel %vm372, 1, 0
        %374 = vset.pattern.permute.xlu0 0
        %375 = vperm.xlu0 %374, %v373
        %v376 = vpop.permute.xlu0 %375
        %vm377 = vcmp.eq.s32.totalorder %v376, 1
        %vm378 = vmand %vm371, %vm377
        %v379 = vld [vmem:[%s5] sm:$0xff]
        %381 = vset.pattern.permute.xlu0 0
        %382 = vperm.xlu0 %381, %v379
        %v383 = vpop.permute.xlu0 %382
        %v385 = vsub.f32 %v361, %v383
        %v386 = vsel %vm378, %v385, %v361
        %v387 = vmul.f32 %v386, 64.0
        %388 = vst [vmem:[%s279] sm:$0xff] %v387
        %s389 = sand.u32 %s167, 1
        %s390 = scalar_lea.sflag [#allocation4], %s389
        %s391 = sand.u32 %s167, 1
        %s392 = smul.addr %s391, 8
        %s393 = scalar_lea.vmem [#allocation5], %s392
        // Predicated region
        $region49: #{tpu_custom_call.1} parent=43 // pred_check
          %p394 = pneg %p177
        $region50: #{tpu_custom_call.1} parent=43 // pred_check_branch
          %396 = sbr.rel (%p394) target = $region52
        $region51: #{tpu_custom_call.1} parent=43 // pred_region
          %s398 = ssub.s32 128, 128
          %399 = vsyncadd %s390, %s398
          %s400 = smul.addr %s23, 128
          %s401 = scalar_lea.hbm %s6, %s400
          %s403 = sshll.u32 %s393, 4
          %s404 = int_to_ptr.vmem [resolvable:$true] %s403
          %406 = dma.vmem_to_hbm [thread:$0]  %s404, 128, %s401, %s390
        $region52: #{tpu_custom_call.1} parent=43 // pred_fallthru
          _
      $region44: #{tpu_custom_call.1} parent=5 // pred_fallthru
        _
      %p407 = scmp.le.s32.totalorder 2, %s18
      // Predicated region
      $region53: #{tpu_custom_call.1} parent=5 // pred_check
        %p408 = pneg %p407
      $region54: #{tpu_custom_call.1} parent=5 // pred_check_branch
        %410 = sbr.rel (%p408) target = $region56
      $region55: #{tpu_custom_call.1} parent=5 // pred_region
        %s411 = ssub.s32 %s18, 2
        // Predicated region
        $region57: #{tpu_custom_call.1} parent=55 // pred_check
          %p412 = pneg %p183
        $region58: #{tpu_custom_call.1} parent=55 // pred_check_branch
          %414 = sbr.rel (%p412) target = $region60
        $region59: #{tpu_custom_call.1} parent=55 // pred_region
          %s415 = sand.u32 %s168, 1
          %s416 = scalar_lea.sflag [#allocation4], %s415
          %s417 = sand.u32 %s168, 1
          %s418 = smul.addr %s417, 8
          %s419 = scalar_lea.vmem [#allocation5], %s418
          %420 = dma.done %s416, 128
        $region60: #{tpu_custom_call.1} parent=55 // pred_fallthru
          _
      $region56: #{tpu_custom_call.1} parent=5 // pred_fallthru
        _
    $region6: #{tpu_custom_call.1} parent=1 // loop_footer
      %s22 = sadd.s32 1, %s18
    $region7: #{tpu_custom_call.1} parent=1 // loop_footer_branch
      %17 = sbr.rel target = $region3
    $region8: #{tpu_custom_call.1} parent=1 // loop_exit
      _
    %421 = vsyncpa [#allocation3], 1
    %s422 = scalar_lea.sflag [#allocation3], 1
    %423 = vsyncpa %s422, 1
    %424 = vsyncpa [#allocation4], 1
    %s425 = scalar_lea.sflag [#allocation4], 1
    %426 = vsyncpa %s425, 1

</llo_original>
